<compile_context>
chip_gen: v7x
topology: tpu7x:2x2x1
jax: 0.10.0
libtpu: 0.0.40
codegen_flags: <defaults>
</compile_context>

<pallas_src>
import functools

import numpy as np
import jax
import jax.numpy as jnp
from jax import lax
from jax.experimental import pallas as pl
from jax.experimental.pallas import tpu as pltpu


def _round_up(x, m):
    return ((x + m - 1) // m) * m


# ---------------------------------------------------------------------------
# Pallas kernels: Gram matrix  inter = M @ M^T  of the flattened binary masks
# ---------------------------------------------------------------------------

def _gram_kernel_single(x_ref, inter_ref):
    """Single-stream path: one (n_pad, tile_d) bf16 tile is both operands.

    The whole (n_pad, n_pad) f32 output stays resident in VMEM (index map is
    constant along the only -- reduction -- grid axis), so the masks are read
    from HBM exactly once.
    """
    @pl.when(pl.program_id(0) == 0)
    def _():
        inter_ref[...] = jnp.zeros_like(inter_ref)

    x = x_ref[...]
    inter_ref[...] += lax.dot_general(
        x, x, (((1,), (1,)), ((), ())), preferred_element_type=jnp.float32)


def _gram_kernel_blocked(a_ref, b_ref, inter_ref):
    """Row-blocked fallback for very large N (Gram matrix too big to reside)."""
    @pl.when(pl.program_id(1) == 0)
    def _():
        inter_ref[...] = jnp.zeros_like(inter_ref)

    inter_ref[...] += lax.dot_general(
        a_ref[...], b_ref[...], (((1,), (1,)), ((), ())),
        preferred_element_type=jnp.float32)


def _pairwise_inter(m2d):
    """All-pairs intersection counts |A_i ∩ A_j| = <m_i, m_j> (binary masks).

    m2d: (N, D) bf16 matrix of flattened binary masks.
    returns: (N, N) float32 Gram matrix.
    """
    n, d = m2d.shape
    d_128 = _round_up(d, 128)

    if n <= 2048:
        # ---- single-stream path: read the mask matrix from HBM exactly once.
        n_pad = _round_up(max(n, 16), 16)            # bf16 sublane tile is 16
        budget_in = 8 * 1024 * 1024                  # double-buffered input
        tile_d = max(128, (budget_in // (4 * n_pad)) // 128 * 128)
        tile_d = min(tile_d, 8192, d_128)
        d_pad = _round_up(d_128, tile_d)
        m_p = jnp.pad(m2d, ((0, n_pad - n), (0, d_pad - d)))

        vmem_limit = 2 * n_pad * n_pad * 4 + 4 * n_pad * tile_d + 4 * 1024 * 1024
        vmem_limit = int(min(max(vmem_limit, 16 * 1024 * 1024),
                             64 * 1024 * 1024))

        inter = pl.pallas_call(
            _gram_kernel_single,
            out_shape=jax.ShapeDtypeStruct((n_pad, n_pad), jnp.float32),
            grid_spec=pltpu.PrefetchScalarGridSpec(
                num_scalar_prefetch=0,
                grid=(d_pad // tile_d,),
                in_specs=[pl.BlockSpec((n_pad, tile_d), lambda k: (0, k))],
                out_specs=pl.BlockSpec((n_pad, n_pad), lambda k: (0, 0))),
            compiler_params=pltpu.CompilerParams(
                dimension_semantics=("arbitrary",),
                vmem_limit_bytes=vmem_limit),
        )(m_p)
        return inter[:n, :n]

    # ---- row-blocked fallback (N > 2048): split rows across the grid so the
    # resident output block stays small; the RHS (all masks) is re-streamed
    # once per row block.
    tn = 256
    n_pad = _round_up(n, tn)
    budget_in = 12 * 1024 * 1024
    tile_d = max(128, (budget_in // (4 * (tn + n_pad))) // 128 * 128)
    tile_d = min(tile_d, 8192, d_128)
    d_pad = _round_up(d_128, tile_d)
    m_p = jnp.pad(m2d, ((0, n_pad - n), (0, d_pad - d)))

    inter = pl.pallas_call(
        _gram_kernel_blocked,
        out_shape=jax.ShapeDtypeStruct((n_pad, n_pad), jnp.float32),
        grid_spec=pltpu.PrefetchScalarGridSpec(
            num_scalar_prefetch=0,
            grid=(n_pad // tn, d_pad // tile_d),
            in_specs=[
                # LHS: this row-block's masks.
                pl.BlockSpec((tn, tile_d), lambda i, k: (i, k)),
                # RHS: all masks (same array, passed a second time).
                pl.BlockSpec((n_pad, tile_d), lambda i, k: (0, k)),
            ],
            out_specs=pl.BlockSpec((tn, n_pad), lambda i, k: (i, 0))),
        compiler_params=pltpu.CompilerParams(
            dimension_semantics=("parallel", "arbitrary"),
            vmem_limit_bytes=48 * 1024 * 1024),
    )(m_p, m_p)
    return inter[:n, :n]


# ---------------------------------------------------------------------------
# Greedy suppression (exact port of the reference double loop)
# ---------------------------------------------------------------------------

def _nms_select(iou, score, threshold):
    """Exact port of the reference suppression loops, vectorized.

    For each row i the inner j-loop's behavior is fully determined by:
      tgt[i]       = first j with iou[i,j] > thr and score[i] > score[j]
                     (the j at which the reference `break`s and sets ind[j]=0),
                     or n if no such j exists;
      self_kill[i] = whether some j < tgt[i] has iou[i,j] > thr and
                     score[j] > score[i] (which sets ind[i]=0 mid-loop).
    The only cross-iteration dependency is whether i was already suppressed,
    so a single O(N) scan reproduces the reference exactly.
    """
    n = score.shape[0]
    thr = jnp.float32(threshold)

    over = iou > thr                                 # NaN > thr -> False (like torch)
    s_i = score[:, None]
    s_j = score[None, :]
    col = jnp.arange(n, dtype=jnp.int32)

    brk = jnp.logical_and(over, s_i > s_j)           # i suppresses j and breaks
    tgt = jnp.min(jnp.where(brk, col[None, :], jnp.int32(n)), axis=1)
    kill = jnp.logical_and(over, s_j > s_i)          # j suppresses i (no break)
    self_kill = jnp.any(
        jnp.logical_and(kill, col[None, :] < tgt[:, None]), axis=1)

    def body(i, active):
        act_i = active[i]
        t = tgt[i]
        t_c = jnp.minimum(t, n - 1)                  # clamp; guarded by `t < n`
        active = active.at[t_c].set(
            jnp.where(jnp.logical_and(act_i, t < n), False, active[t_c]))
        active = active.at[i].set(
            jnp.where(jnp.logical_and(act_i, self_kill[i]), False, active[i]))
        return active

    return lax.fori_loop(0, n, body, jnp.ones((n,), jnp.bool_))


@functools.partial(jax.jit, static_argnames=("threshold",))
def nms_forward(mask, threshold=0.5):
    """JAX/Pallas port of nms.forward.

    mask: [B, N, X, Y, Z] float binary instance masks (B == 1 as in the ref).
    returns: [N] bool keep indicator.
    """
    n = mask.shape[1]
    if n == 0:
        return jnp.zeros((0,), dtype=bool)

    if mask.shape[0] == 1:
        m2d = mask[0].reshape(n, -1)                 # no transpose needed for B == 1
    else:
        m2d = jnp.moveaxis(mask, 1, 0).reshape(n, -1)

    # Binary {0,1} masks are exact in bf16; cast fuses with the pad inside jit.
    inter = _pairwise_inter(m2d.astype(jnp.bfloat16))
    score = jnp.diagonal(inter)                      # == per-instance voxel count
    union = score[:, None] + score[None, :] - inter
    iou = inter / union                              # NaN when union == 0 (torch 0/0)
    return _nms_select(iou, score, threshold)


# ---------------------------------------------------------------------------
# Reference + test
# ---------------------------------------------------------------------------

def _reference_nms(mask, threshold=0.5):
    """Literal numpy port of the PyTorch loops for verification."""
    mask = np.asarray(mask, dtype=np.float32)
    n = mask.shape[1]
    if n == 0:
        return np.zeros((0,), dtype=bool)
    ind = np.ones(n, dtype=np.int32)
    score = mask[0].reshape(n, -1).sum(-1)
    for i in range(n):
        if ind[i] == 0:
            continue
        for j in range(n):
            val = mask[:, i] + mask[:, j]
            inter = float((val > 1).sum())
            union = float((val > 0).sum())
            iou = inter / union if union > 0 else float("nan")
            if iou > threshold:
                if score[j] > score[i]:
                    ind[i] = 0
                if score[i] > score[j]:
                    ind[j] = 0
                    break
    return ind > 0


if __name__ == "__main__":
    key = jax.random.PRNGKey(0)
    B, N, X, Y, Z = 1, 8, 16, 16, 4
    # Per-instance fill probability: the dense masks overlap heavily (IoU > 0.5)
    # so some suppression actually happens.
    probs = jnp.array([0.85, 0.80, 0.75, 0.30, 0.25, 0.20, 0.15, 0.10],
                      dtype=jnp.float32)
    u = jax.random.uniform(key, (B, N, X, Y, Z))
    mask = (u < probs[None, :, None, None, None]).astype(jnp.float32)

    keep = nms_forward(mask, 0.5)
    keep = jax.block_until_ready(keep)

    ref = _reference_nms(np.asarray(mask), 0.5)
    assert keep.shape == (N,) and keep.dtype == jnp.bool_
    assert np.array_equal(np.asarray(keep), ref), (np.asarray(keep), ref)
    print("KERNEL_OK")
</pallas_src>

<mosaic_0001>
module attributes {stable_mosaic.version = 11 : i64} {
  func.func @_gram_kernel_single(%arg0: i32, %arg1: memref<16x1024xbf16, #tpu.memory_space<vmem>>, %arg2: memref<16x16xf32, #tpu.memory_space<vmem>>) attributes {dimension_semantics = [#tpu.dimension_semantics<arbitrary>], iteration_bounds = array<i64: 1>, scalar_prefetch = 0 : i64, scratch_operands = 0 : i64, tpu.core_type = #tpu.core_type<tc>, window_params = [{transform_indices = @transform_0, window_bounds = array<i64: 16, 1024>}, {pipeline_mode = #tpu.pipeline_mode<synchronous>, transform_indices = @transform_1, window_bounds = array<i64: 16, 16>}]} {
    %c0_i32 = arith.constant 0 : i32
    %0 = arith.cmpi eq, %arg0, %c0_i32 : i32
    %1 = arith.extui %0 : i1 to i32
    %c0_i32_0 = arith.constant 0 : i32
    %2 = arith.cmpi ne, %1, %c0_i32_0 : i32
    scf.if %2 {
      %cst_6 = arith.constant 0.000000e+00 : f32
      %8 = vector.broadcast %cst_6 : f32 to vector<16x16xf32>
      %c0_7 = arith.constant 0 : index
      %c0_8 = arith.constant 0 : index
      %9 = vector.load %arg2[%c0_7, %c0_8] : memref<16x16xf32, #tpu.memory_space<vmem>>, vector<16x16xf32>
      tpu.vector_store %arg2[%c0_7, %c0_8], %8 {strides = array<i32>} : memref<16x16xf32, #tpu.memory_space<vmem>>, vector<16x16xf32>,
    } else {
    }
    %c0 = arith.constant 0 : index
    %c0_1 = arith.constant 0 : index
    %3 = vector.load %arg1[%c0, %c0_1] : memref<16x1024xbf16, #tpu.memory_space<vmem>>, vector<16x1024xbf16>
    %c0_2 = arith.constant 0 : index
    %c0_3 = arith.constant 0 : index
    %4 = vector.load %arg2[%c0_2, %c0_3] : memref<16x16xf32, #tpu.memory_space<vmem>>, vector<16x16xf32>
    %cst = arith.constant dense<0.000000e+00> : vector<16x16xf32>
    %5 = tpu.matmul %3, %3, %cst {dimension_numbers = #tpu.dot_dimension_numbers<[1], [1], [0], [0], [0, 0, 1, 0], [], []>} : vector<16x1024xbf16>, vector<16x1024xbf16>, vector<16x16xf32> -> vector<16x16xf32>
    %6 = arith.addf %4, %5 : vector<16x16xf32>
    %c0_4 = arith.constant 0 : index
    %c0_5 = arith.constant 0 : index
    %7 = vector.load %arg2[%c0_4, %c0_5] : memref<16x16xf32, #tpu.memory_space<vmem>>, vector<16x16xf32>
    tpu.vector_store %arg2[%c0_4, %c0_5], %6 {strides = array<i32>} : memref<16x16xf32, #tpu.memory_space<vmem>>, vector<16x16xf32>,
    return
  }
  func.func @transform_0(%arg0: i32) -> (i32, i32) {
    %c0_i32 = arith.constant 0 : i32
    %c0_i32_0 = arith.constant 0 : i32
    return %c0_i32, %arg0 : i32, i32
  }
  func.func @transform_1(%arg0: i32) -> (i32, i32) {
    %c0_i32 = arith.constant 0 : i32
    %c0_i32_0 = arith.constant 0 : i32
    %c0_i32_1 = arith.constant 0 : i32
    return %c0_i32, %c0_i32_0 : i32, i32
  }
}

</mosaic_0001>

<llo_original>
// kernel: nms_forward.1
$region0: #{nms_forward.1}
  #allocation0 [shape = 'u32[]', space=smem, size = 0x4, offset = 0x4, fixed_abs, tag = 'smem constant byte address 0x4 - core index']
  #allocation1 [shape = 'u32[144,128]{1,0:T(1,128)}', space=vmem, size = 0x12000, scoped, tag = 'internal scratch']
  %s0 = inlined_call_operand.vmem [shape: bf16[16,1024], index: 0, kind: input, shape index: {}]
  %s1 = inlined_call_operand.vmem [shape: f32[16,16], index: 1, kind: output, shape index: {}]
  %s2 = sld [smem:[#allocation0]]
  $region18: #{nms_forward.1} parent=0
    _
  %s4 = ssub.s32 1, %s2
  %s5 = scalar_select 0, %s4, %s2
  // Predicated region
  $region2: #{nms_forward.1} parent=0 // pred_check
    _
  $region3: #{nms_forward.1} parent=0 // pred_check_branch
    %7 = sbr.rel (0) target = $region5
  $region4: #{nms_forward.1} parent=0 // pred_region
    _
  $region5: #{nms_forward.1} parent=0 // pred_fallthru
    _
  %p9 = scmp.eq.s32.totalorder 0, 0
  // Predicated region
  $region6: #{nms_forward.1} parent=0 // pred_check
    %p10 = pneg %p9
  $region7: #{nms_forward.1} parent=0 // pred_check_branch
    %12 = sbr.rel (%p10) target = $region9
  $region8: #{nms_forward.1} parent=0 // pred_region
    %vm13 = vcmask 130048
    %14 = vst.msk [vmem:[%s1] sm:$0xff] %vm13, 0.0
    %15 = vst.msk [vmem:[%s1 + $0x8] sm:$0xff] %vm13, 0.0
  $region9: #{nms_forward.1} parent=0 // pred_fallthru
    _
  %v16 = vld [vmem:[%s0] sm:$0xff]
  %v17 = vld [vmem:[%s0 + $0x8] sm:$0xff]
  %v18 = vld [vmem:[%s0 + $0x10] sm:$0xff]
  %v19 = vld [vmem:[%s0 + $0x18] sm:$0xff]
  %v20 = vld [vmem:[%s0 + $0x20] sm:$0xff]
  %v21 = vld [vmem:[%s0 + $0x28] sm:$0xff]
  %v22 = vld [vmem:[%s0 + $0x30] sm:$0xff]
  %v23 = vld [vmem:[%s0 + $0x38] sm:$0xff]
  %v24 = vld [vmem:[%s1] sm:$0xff]
  %v25 = vld [vmem:[%s1 + $0x8] sm:$0xff]
  %v34 = vunpack.c.l.b16 %v16
  %v35 = vunpack.c.h.b16 %v16
  %v36 = vunpack.c.l.b16 %v17
  %v37 = vunpack.c.h.b16 %v17
  %v38 = vunpack.c.l.b16 %v18
  %v39 = vunpack.c.h.b16 %v18
  %v40 = vunpack.c.l.b16 %v19
  %v41 = vunpack.c.h.b16 %v19
  %v42 = vunpack.c.l.b16 %v20
  %v43 = vunpack.c.h.b16 %v20
  %v44 = vunpack.c.l.b16 %v21
  %v45 = vunpack.c.h.b16 %v21
  %v46 = vunpack.c.l.b16 %v22
  %v47 = vunpack.c.h.b16 %v22
  %v48 = vunpack.c.l.b16 %v23
  %v49 = vunpack.c.h.b16 %v23
  %v50 = vpack.c.b16 %v42, %v34
  %v51 = vpack.c.b16 %v43, %v35
  %v52 = vpack.c.b16 %v44, %v36
  %v53 = vpack.c.b16 %v45, %v37
  %v54 = vpack.c.b16 %v46, %v38
  %v55 = vpack.c.b16 %v47, %v39
  %v56 = vpack.c.b16 %v48, %v40
  %v57 = vpack.c.b16 %v49, %v41
  %66 = vmatprep.subr.bf16.mxu0 %v51
  %67 = vmatpush1.bf16.xpose.msra.mxu0 %v50
  %68 = vmatprep.subr.bf16.mxu0 0
  %69 = vmatpush1.bf16.xpose.msra.mxu0 0
  %70 = vmatprep.subr.bf16.mxu0 0
  %71 = vmatpush1.bf16.xpose.msra.mxu0 0
  %72 = vmatprep.subr.bf16.mxu0 0
  %73 = vmatpush1.bf16.xpose.msra.mxu0 0
  %74 = vmatprep.subr.bf16.mxu0 0
  %75 = vmatpush1.bf16.xpose.msra.mxu0 0
  %76 = vmatprep.subr.bf16.mxu0 0
  %77 = vmatpush1.bf16.xpose.msra.mxu0 0
  %78 = vmatprep.subr.bf16.mxu0 0
  %79 = vmatpush1.bf16.xpose.msra.mxu0 0
  %80 = vmatprep.subr.bf16.mxu0 0
  %81 = vmatpush1.bf16.xpose.msra.mxu0 0
  %82 = vmatprep.subr.bf16.mxu0 0
  %83 = vmatpush1.bf16.xpose.msra.mxu0 0
  %84 = vmatprep.subr.bf16.mxu0 0
  %85 = vmatpush1.bf16.xpose.msra.mxu0 0
  %86 = vmatprep.subr.bf16.mxu0 0
  %87 = vmatpush1.bf16.xpose.msra.mxu0 0
  %88 = vmatprep.subr.bf16.mxu0 0
  %89 = vmatpush1.bf16.xpose.msra.mxu0 0
  %90 = vmatprep.subr.bf16.mxu0 0
  %91 = vmatpush1.bf16.xpose.msra.mxu0 0
  %92 = vmatprep.subr.bf16.mxu0 0
  %93 = vmatpush1.bf16.xpose.msra.mxu0 0
  %94 = vmatprep.subr.bf16.mxu0 0
  %95 = vmatpush1.bf16.xpose.msra.mxu0 0
  %96 = vmatprep.subr.bf16.mxu0 0
  %97 = vmatpush1.bf16.xpose.msra.mxu0 0
  %98 = vmatprep.mubr.bf16.mxu0 %v51
  %99 = vmatmul.mubr.bf16.gmra.mrb[0].mxu0 %v50
  %v100 = vpop.f32.mrb[0].mxu0
  %v101 = vadd.f32 0.0, %v100
  %v102 = vpop.f32.mrb[0].mxu0
  %v103 = vpop.f32.mrb[0].mxu0
  %v104 = vadd.f32 0.0, %v103
  %v105 = vpop.f32.mrb[0].mxu0
  %106 = vdwg.mxu0
  %107 = vmatprep.subr.bf16.mxu0 %v53
  %108 = vmatpush1.bf16.xpose.msra.mxu0 %v52
  %109 = vmatprep.subr.bf16.mxu0 0
  %110 = vmatpush1.bf16.xpose.msra.mxu0 0
  %111 = vmatprep.subr.bf16.mxu0 0
  %112 = vmatpush1.bf16.xpose.msra.mxu0 0
  %113 = vmatprep.subr.bf16.mxu0 0
  %114 = vmatpush1.bf16.xpose.msra.mxu0 0
  %115 = vmatprep.subr.bf16.mxu0 0
  %116 = vmatpush1.bf16.xpose.msra.mxu0 0
  %117 = vmatprep.subr.bf16.mxu0 0
  %118 = vmatpush1.bf16.xpose.msra.mxu0 0
  %119 = vmatprep.subr.bf16.mxu0 0
  %120 = vmatpush1.bf16.xpose.msra.mxu0 0
  %121 = vmatprep.subr.bf16.mxu0 0
  %122 = vmatpush1.bf16.xpose.msra.mxu0 0
  %123 = vmatprep.subr.bf16.mxu0 0
  %124 = vmatpush1.bf16.xpose.msra.mxu0 0
  %125 = vmatprep.subr.bf16.mxu0 0
  %126 = vmatpush1.bf16.xpose.msra.mxu0 0
  %127 = vmatprep.subr.bf16.mxu0 0
  %128 = vmatpush1.bf16.xpose.msra.mxu0 0
  %129 = vmatprep.subr.bf16.mxu0 0
  %130 = vmatpush1.bf16.xpose.msra.mxu0 0
  %131 = vmatprep.subr.bf16.mxu0 0
  %132 = vmatpush1.bf16.xpose.msra.mxu0 0
  %133 = vmatprep.subr.bf16.mxu0 0
  %134 = vmatpush1.bf16.xpose.msra.mxu0 0
  %135 = vmatprep.subr.bf16.mxu0 0
  %136 = vmatpush1.bf16.xpose.msra.mxu0 0
  %137 = vmatprep.subr.bf16.mxu0 0
  %138 = vmatpush1.bf16.xpose.msra.mxu0 0
  %139 = vmatprep.mubr.bf16.mxu0 %v53
  %140 = vmatmul.mubr.bf16.gmra.mrb[0].mxu0 %v52
  %v141 = vpop.f32.mrb[0].mxu0
  %v142 = vadd.f32 %v101, %v141
  %v143 = vpop.f32.mrb[0].mxu0
  %v144 = vpop.f32.mrb[0].mxu0
  %v145 = vadd.f32 %v104, %v144
  %v146 = vpop.f32.mrb[0].mxu0
  %147 = vdwg.mxu0
  %148 = vmatprep.subr.bf16.mxu0 %v55
  %149 = vmatpush1.bf16.xpose.msra.mxu0 %v54
  %150 = vmatprep.subr.bf16.mxu0 0
  %151 = vmatpush1.bf16.xpose.msra.mxu0 0
  %152 = vmatprep.subr.bf16.mxu0 0
  %153 = vmatpush1.bf16.xpose.msra.mxu0 0
  %154 = vmatprep.subr.bf16.mxu0 0
  %155 = vmatpush1.bf16.xpose.msra.mxu0 0
  %156 = vmatprep.subr.bf16.mxu0 0
  %157 = vmatpush1.bf16.xpose.msra.mxu0 0
  %158 = vmatprep.subr.bf16.mxu0 0
  %159 = vmatpush1.bf16.xpose.msra.mxu0 0
  %160 = vmatprep.subr.bf16.mxu0 0
  %161 = vmatpush1.bf16.xpose.msra.mxu0 0
  %162 = vmatprep.subr.bf16.mxu0 0
  %163 = vmatpush1.bf16.xpose.msra.mxu0 0
  %164 = vmatprep.subr.bf16.mxu0 0
  %165 = vmatpush1.bf16.xpose.msra.mxu0 0
  %166 = vmatprep.subr.bf16.mxu0 0
  %167 = vmatpush1.bf16.xpose.msra.mxu0 0
  %168 = vmatprep.subr.bf16.mxu0 0
  %169 = vmatpush1.bf16.xpose.msra.mxu0 0
  %170 = vmatprep.subr.bf16.mxu0 0
  %171 = vmatpush1.bf16.xpose.msra.mxu0 0
  %172 = vmatprep.subr.bf16.mxu0 0
  %173 = vmatpush1.bf16.xpose.msra.mxu0 0
  %174 = vmatprep.subr.bf16.mxu0 0
  %175 = vmatpush1.bf16.xpose.msra.mxu0 0
  %176 = vmatprep.subr.bf16.mxu0 0
  %177 = vmatpush1.bf16.xpose.msra.mxu0 0
  %178 = vmatprep.subr.bf16.mxu0 0
  %179 = vmatpush1.bf16.xpose.msra.mxu0 0
  %180 = vmatprep.mubr.bf16.mxu0 %v55
  %181 = vmatmul.mubr.bf16.gmra.mrb[0].mxu0 %v54
  %v182 = vpop.f32.mrb[0].mxu0
  %v183 = vadd.f32 %v142, %v182
  %v184 = vpop.f32.mrb[0].mxu0
  %v185 = vpop.f32.mrb[0].mxu0
  %v186 = vadd.f32 %v145, %v185
  %v187 = vpop.f32.mrb[0].mxu0
  %188 = vdwg.mxu0
  %189 = vmatprep.subr.bf16.mxu0 %v57
  %190 = vmatpush1.bf16.xpose.msra.mxu0 %v56
  %191 = vmatprep.subr.bf16.mxu0 0
  %192 = vmatpush1.bf16.xpose.msra.mxu0 0
  %193 = vmatprep.subr.bf16.mxu0 0
  %194 = vmatpush1.bf16.xpose.msra.mxu0 0
  %195 = vmatprep.subr.bf16.mxu0 0
  %196 = vmatpush1.bf16.xpose.msra.mxu0 0
  %197 = vmatprep.subr.bf16.mxu0 0
  %198 = vmatpush1.bf16.xpose.msra.mxu0 0
  %199 = vmatprep.subr.bf16.mxu0 0
  %200 = vmatpush1.bf16.xpose.msra.mxu0 0
  %201 = vmatprep.subr.bf16.mxu0 0
  %202 = vmatpush1.bf16.xpose.msra.mxu0 0
  %203 = vmatprep.subr.bf16.mxu0 0
  %204 = vmatpush1.bf16.xpose.msra.mxu0 0
  %205 = vmatprep.subr.bf16.mxu0 0
  %206 = vmatpush1.bf16.xpose.msra.mxu0 0
  %207 = vmatprep.subr.bf16.mxu0 0
  %208 = vmatpush1.bf16.xpose.msra.mxu0 0
  %209 = vmatprep.subr.bf16.mxu0 0
  %210 = vmatpush1.bf16.xpose.msra.mxu0 0
  %211 = vmatprep.subr.bf16.mxu0 0
  %212 = vmatpush1.bf16.xpose.msra.mxu0 0
  %213 = vmatprep.subr.bf16.mxu0 0
  %214 = vmatpush1.bf16.xpose.msra.mxu0 0
  %215 = vmatprep.subr.bf16.mxu0 0
  %216 = vmatpush1.bf16.xpose.msra.mxu0 0
  %217 = vmatprep.subr.bf16.mxu0 0
  %218 = vmatpush1.bf16.xpose.msra.mxu0 0
  %219 = vmatprep.subr.bf16.mxu0 0
  %220 = vmatpush1.bf16.xpose.msra.mxu0 0
  %221 = vmatprep.mubr.bf16.mxu0 %v57
  %222 = vmatmul.mubr.bf16.gmra.mrb[0].mxu0 %v56
  %v223 = vpop.f32.mrb[0].mxu0
  %v224 = vadd.f32 %v183, %v223
  %v225 = vpop.f32.mrb[0].mxu0
  %v226 = vpop.f32.mrb[0].mxu0
  %v227 = vadd.f32 %v186, %v226
  %v228 = vpop.f32.mrb[0].mxu0
  %229 = vdwg.mxu0
  %v230 = vadd.f32 %v24, %v224
  %v231 = vadd.f32 %v25, %v227
  %vm232 = vcmask 130048
  %233 = vst.msk [vmem:[%s1] sm:$0xff] %vm232, %v230
  %234 = vst.msk [vmem:[%s1 + $0x8] sm:$0xff] %vm232, %v231
  // Predicated region
  $region10: #{nms_forward.1} parent=0 // pred_check
    _
  $region11: #{nms_forward.1} parent=0 // pred_check_branch
    %236 = sbr.rel (0) target = $region13
  $region12: #{nms_forward.1} parent=0 // pred_region
    _
  $region13: #{nms_forward.1} parent=0 // pred_fallthru
    _
  // Predicated region
  $region14: #{nms_forward.1} parent=0 // pred_check
    _
  $region15: #{nms_forward.1} parent=0 // pred_check_branch
    %238 = sbr.rel (0) target = $region17
  $region16: #{nms_forward.1} parent=0 // pred_region
    _
  $region17: #{nms_forward.1} parent=0 // pred_fallthru
    _

</llo_original>
